<compile_context>
chip_gen: v5e
topology: v5e:2x2
jax: 0.10.0
libtpu: 0.0.40
codegen_flags: <defaults>
</compile_context>

<pallas_src>
import jax
import jax.numpy as jnp
from jax.experimental import pallas as pl
from jax.experimental.pallas import tpu as pltpu


def _round_up(x, m):
    return ((x + m - 1) // m) * m


def _attention_kernel(lcf_ref, q_ref, out_ref):
    # lcf_ref : (BB, C, N)  native dtype   q_ref : (BB, C) f32   out_ref : (BB, C)
    lcf = lcf_ref[...].astype(jnp.float32)               # cast in-kernel
    q = q_ref[...].astype(jnp.float32)

    # Logits: VPU broadcast-multiply + sublane-axis reduce (C is tiny).
    c = jnp.sum(lcf * q[:, :, None], axis=1)              # (BB, N)

    # Numerically-stable softmax numerator; exact normalization is deferred to
    # the tiny (BB, C) result (saves an (BB,N) multiply and keeps it exact).
    m = jnp.max(c, axis=-1, keepdims=True)                 # (BB, 1)
    e = jnp.exp(c - m)                                     # (BB, N)
    denom = jnp.sum(e, axis=-1, keepdims=True)             # (BB, 1)

    ga = jnp.sum(lcf * e[:, None, :], axis=-1)             # (BB, C)
    out_ref[...] = (ga / denom).astype(out_ref.dtype)      # exact division


def attention_pallas(lcf, gbf, wproj, pcw, method='dp',
                     block_b=None, vmem_limit_bytes=None):
    """Forward of the PyTorch Attention module.

    lcf:   (B, C, H, W) local feature (NCHW)
    gbf:   (B, G)       global feature
    wproj: (C, G)       weight of nn.Linear(G, C, bias=False)
    pcw:   (1, C)       weight of nn.Linear(C, 1, bias=False)
    returns ga: (B, C)
    """
    B, C, H, W = lcf.shape
    N = H * W
    G = gbf.shape[1]

    # --- hoisted per-batch query vector (single XLA matmul, not in-kernel) ---
    if method == 'dp':
        q = (gbf @ wproj.T) if G != C else gbf                  # (B, C)
    elif method == 'pc':
        # softmax(pcw.lcf + <gbf_pj,pcw>) == softmax(pcw.lcf): the gbf term is
        # constant over the spatial axis, so gbf / wproj drop out.
        q = jnp.broadcast_to(pcw.reshape(1, C), (B, C))
    else:
        raise ValueError(f'No such method {method}')
    q = q.astype(jnp.float32)

    # Stream lcf in its native dtype (no wrapper astype => no extra HBM pass).
    lcf_rs = lcf.reshape(B, C, N)
    out_dtype = lcf.dtype

    # --- block sizing (counting sublane/lane padding in the VMEM budget) -----
    dt = jnp.dtype(lcf_rs.dtype)
    sublane = max(8, 32 // dt.itemsize)            # 8 for f32, 16 bf16, 32 int8
    lcf_bytes_per_batch = _round_up(C, sublane) * _round_up(N, 128) * dt.itemsize

    if block_b is None:
        target = 4 << 20                           # ~4 MiB of padded lcf / step
        bb = int(max(1, min(B, target // max(1, lcf_bytes_per_batch))))
        if B >= 16:
            bb = max(1, min(bb, B // 2))           # >=2 steps: both v7x TCs work
    else:
        bb = int(max(1, min(block_b, B)))

    # q/out blocks are (bb, C): the sublane dim must be a multiple of 8 unless
    # the block spans the whole batch.  Prefer a divisor of B (no pad traffic).
    if bb != B:
        bb = max(8, (bb // 8) * 8)
        if bb >= B:
            bb = B
        else:
            for cand in range(bb, 7, -8):
                if B % cand == 0:
                    bb = cand
                    break
    block_b = bb

    num_blocks = pl.cdiv(B, block_b)
    b_pad = num_blocks * block_b
    if b_pad != B:
        # Rare (only when no multiple-of-8 divisor of B fits the target).
        # Padded rows give a uniform softmax over zeros -> 0, sliced off below.
        lcf_rs = jnp.pad(lcf_rs, ((0, b_pad - B), (0, 0), (0, 0)))
        q = jnp.pad(q, ((0, b_pad - B), (0, 0)))

    # --- VMEM budget: double-buffered, layout-padded block bytes -------------
    if vmem_limit_bytes is None:
        lcf_blk = block_b * lcf_bytes_per_batch
        vec_rows = _round_up(block_b, 8) * _round_up(C, 128)
        q_blk = vec_rows * 4
        out_blk = vec_rows * jnp.dtype(out_dtype).itemsize
        vmem_limit_bytes = 2 * (lcf_blk + q_blk + out_blk) + (4 << 20)
        vmem_limit_bytes = min(vmem_limit_bytes, 64 << 20)   # v7x physical cap

    out = pl.pallas_call(
        _attention_kernel,
        out_shape=jax.ShapeDtypeStruct((b_pad, C), out_dtype),
        grid_spec=pltpu.PrefetchScalarGridSpec(
            num_scalar_prefetch=0,
            grid=(num_blocks,),
            in_specs=[
                pl.BlockSpec((block_b, C, N), lambda i: (i, 0, 0)),   # lcf
                pl.BlockSpec((block_b, C), lambda i: (i, 0)),         # q
            ],
            out_specs=pl.BlockSpec((block_b, C), lambda i: (i, 0)),
        ),
        compiler_params=pltpu.CompilerParams(
            dimension_semantics=("parallel",),
            vmem_limit_bytes=int(vmem_limit_bytes)),
    )(lcf_rs, q)

    return out[:B]


def attention_ref(lcf, gbf, wproj, pcw, method='dp'):
    """Pure-JAX reference mirroring the PyTorch forward exactly."""
    B, C, H, W = lcf.shape
    N = H * W
    G = gbf.shape[1]
    gbf_pj = gbf @ wproj.T if G != C else gbf                  # (B, C)
    lcf_rs = lcf.reshape(B, C, N)                              # (B, C, N)
    if method == 'dp':
        c = jnp.einsum('bnc,bc->bn', lcf_rs.transpose(0, 2, 1), gbf_pj)
    elif method == 'pc':
        add = lcf_rs.transpose(0, 2, 1) + gbf_pj[:, None, :]   # (B, N, C)
        c = jnp.einsum('bnc,c->bn', add, pcw[0])
    else:
        raise ValueError(method)
    a = jax.nn.softmax(c, axis=1)                              # (B, N)
    ga = jnp.einsum('bcn,bn->bc', lcf_rs, a)                   # (B, C)
    return ga


if __name__ == "__main__":
    # Module config: local_shape = (C, H, W), global_shape = G
    B, C, H, W, G = 2, 4, 16, 16, 32

    key = jax.random.PRNGKey(0)
    k_lcf, k_gbf, k_wp, k_pc, k_lcf2, k_gbf2 = jax.random.split(key, 6)

    lcf = jax.random.normal(k_lcf, (B, C, H, W), dtype=jnp.float32)
    gbf = jax.random.normal(k_gbf, (B, G), dtype=jnp.float32)
    # Deterministic synthetic parameters (nn.Linear weight shape: (out, in)).
    wproj = jax.random.normal(k_wp, (C, G), dtype=jnp.float32) * 0.1   # Linear(G->C)
    pcw = jax.random.normal(k_pc, (1, C), dtype=jnp.float32) * 0.1     # Linear(C->1)

    ok = True
    for method in ('dp', 'pc'):
        out = jax.block_until_ready(
            attention_pallas(lcf, gbf, wproj, pcw, method=method))
        ref = attention_ref(lcf, gbf, wproj, pcw, method=method)
        if not jnp.allclose(out, ref, atol=1e-4, rtol=1e-4):
            ok = False
            print(f"MISMATCH for method={method}: max abs err "
                  f"{float(jnp.max(jnp.abs(out - ref)))}")

    # Also exercise the multi-block ('parallel' grid) path with a larger batch.
    B2 = 48
    lcf2 = jax.random.normal(k_lcf2, (B2, C, H, W), dtype=jnp.float32)
    gbf2 = jax.random.normal(k_gbf2, (B2, G), dtype=jnp.float32)
    out2 = jax.block_until_ready(
        attention_pallas(lcf2, gbf2, wproj, pcw, method='dp'))
    ref2 = attention_ref(lcf2, gbf2, wproj, pcw, method='dp')
    if not jnp.allclose(out2, ref2, atol=1e-4, rtol=1e-4):
        ok = False
        print(f"MISMATCH for multi-block dp: max abs err "
              f"{float(jnp.max(jnp.abs(out2 - ref2)))}")

    if ok:
        print("KERNEL_OK")
</pallas_src>

<mosaic_0001>
module attributes {stable_mosaic.version = 11 : i64} {
  func.func @_attention_kernel(%arg0: i32, %arg1: memref<2x4x256xf32, #tpu.memory_space<vmem>>, %arg2: memref<2x4xf32, #tpu.memory_space<vmem>>, %arg3: memref<2x4xf32, #tpu.memory_space<vmem>>) attributes {dimension_semantics = [#tpu.dimension_semantics<parallel>], iteration_bounds = array<i64: 1>, scalar_prefetch = 0 : i64, scratch_operands = 0 : i64, tpu.core_type = #tpu.core_type<tc>, window_params = [{transform_indices = @transform_0, window_bounds = array<i64: 2, 4, 256>}, {transform_indices = @transform_1, window_bounds = array<i64: 2, 4>}, {transform_indices = @transform_2, window_bounds = array<i64: 2, 4>}]} {
    %c0 = arith.constant 0 : index
    %c0_0 = arith.constant 0 : index
    %c0_1 = arith.constant 0 : index
    %0 = vector.load %arg1[%c0, %c0_0, %c0_1] : memref<2x4x256xf32, #tpu.memory_space<vmem>>, vector<2x4x256xf32>
    %c0_2 = arith.constant 0 : index
    %c0_3 = arith.constant 0 : index
    %1 = vector.load %arg2[%c0_2, %c0_3] : memref<2x4xf32, #tpu.memory_space<vmem>>, vector<2x4xf32>
    %2 = vector.shape_cast %1 : vector<2x4xf32> to vector<2x4x1xf32>
    %3 = vector.broadcast %2 : vector<2x4x1xf32> to vector<2x4x256xf32>
    %4 = arith.mulf %0, %3 : vector<2x4x256xf32>
    %cst = arith.constant dense<0.000000e+00> : vector<2x256xf32>
    %5 = vector.multi_reduction <add>, %4, %cst [1] : vector<2x4x256xf32> to vector<2x256xf32>
    %cst_4 = arith.constant dense<0xFF800000> : vector<2xf32>
    %6 = vector.multi_reduction <maximumf>, %5, %cst_4 [1] : vector<2x256xf32> to vector<2xf32>
    %7 = vector.shape_cast %6 : vector<2xf32> to vector<2x1xf32>
    %8 = vector.broadcast %7 : vector<2x1xf32> to vector<2x256xf32>
    %9 = arith.subf %5, %8 : vector<2x256xf32>
    %10 = math.exp %9 : vector<2x256xf32>
    %cst_5 = arith.constant dense<0.000000e+00> : vector<2xf32>
    %11 = vector.multi_reduction <add>, %10, %cst_5 [1] : vector<2x256xf32> to vector<2xf32>
    %12 = vector.shape_cast %11 : vector<2xf32> to vector<2x1xf32>
    %13 = vector.shape_cast %10 : vector<2x256xf32> to vector<2x1x256xf32>
    %14 = vector.broadcast %13 : vector<2x1x256xf32> to vector<2x4x256xf32>
    %15 = arith.mulf %0, %14 : vector<2x4x256xf32>
    %cst_6 = arith.constant dense<0.000000e+00> : vector<2x4xf32>
    %16 = vector.multi_reduction <add>, %15, %cst_6 [2] : vector<2x4x256xf32> to vector<2x4xf32>
    %17 = vector.broadcast %12 : vector<2x1xf32> to vector<2x4xf32>
    %18 = arith.divf %16, %17 : vector<2x4xf32>
    %c0_7 = arith.constant 0 : index
    %c0_8 = arith.constant 0 : index
    %19 = vector.load %arg3[%c0_7, %c0_8] : memref<2x4xf32, #tpu.memory_space<vmem>>, vector<2x4xf32>
    tpu.vector_store %arg3[%c0_7, %c0_8], %18 {strides = array<i32>} : memref<2x4xf32, #tpu.memory_space<vmem>>, vector<2x4xf32>,
    return
  }
  func.func @transform_0(%arg0: i32) -> (i32, i32, i32) {
    %c0_i32 = arith.constant 0 : i32
    %c0_i32_0 = arith.constant 0 : i32
    %c0_i32_1 = arith.constant 0 : i32
    return %arg0, %c0_i32, %c0_i32_0 : i32, i32, i32
  }
  func.func @transform_1(%arg0: i32) -> (i32, i32) {
    %c0_i32 = arith.constant 0 : i32
    %c0_i32_0 = arith.constant 0 : i32
    return %arg0, %c0_i32 : i32, i32
  }
  func.func @transform_2(%arg0: i32) -> (i32, i32) {
    %c0_i32 = arith.constant 0 : i32
    %c0_i32_0 = arith.constant 0 : i32
    return %arg0, %c0_i32 : i32, i32
  }
}

</mosaic_0001>

<llo_original>
// kernel: tpu_custom_call.1
$region0: #{tpu_custom_call.1}
  #allocation0 [shape = 'u32[]', space=smem, size = 0x4, offset = 0x4, fixed_abs, tag = 'smem constant byte address 0x4 - core index']
  #allocation1 [shape = 'u32[72,128]{1,0:T(1,128)}', space=vmem, size = 0x9000, scoped, tag = 'internal scratch']
  %s0 = inlined_call_operand.hbm [shape: f32[2,4,256], index: 0, kind: input, shape index: {}]
  %s1 = inlined_call_operand.hbm [shape: f32[2,4], index: 1, kind: input, shape index: {}]
  %s2 = inlined_call_operand.hbm [shape: f32[2,4], index: 2, kind: output, shape index: {}]
  %s3 = sld [smem:[#allocation0]]
  $region26: #{tpu_custom_call.1} parent=0
    _
  %s5 = ssub.s32 1, %s3
  %s6 = scalar_select 0, %s5, %s3
  $region1: #{tpu_custom_call.1} parent=0
    #allocation2 [shape = 'u8[8192]{0}', space=vmem, size = 0x2000, scoped, tag = 'input window, operand 0, single buffered']
    #allocation3 [shape = 's32[1]{0}', space=sflag, size = 0x4, scoped, tag = 'scoped memory for tpu_custom_call.1']
    #allocation4 [shape = 's32[1]{0}', space=sflag, size = 0x4, scoped, tag = 'scoped memory for tpu_custom_call.1']
    #allocation5 [shape = 'u8[1024]{0}', space=vmem, size = 0x400, scoped, tag = 'input window, operand 1, single buffered']
    #allocation6 [shape = 's32[1]{0}', space=sflag, size = 0x4, scoped, tag = 'scoped memory for tpu_custom_call.1']
    #allocation7 [shape = 'u8[1024]{0}', space=vmem, size = 0x400, scoped, tag = 'output window, operand 0, single buffered']
    %7 = vsyncpa [#allocation3], 0
    %8 = vsyncpa [#allocation6], 0
    %9 = vsyncpa [#allocation4], 0
    // Predicated region
    $region2: #{tpu_custom_call.1} parent=1 // pred_check
      _
    $region3: #{tpu_custom_call.1} parent=1 // pred_check_branch
      %11 = sbr.rel (0) target = $region5
    $region4: #{tpu_custom_call.1} parent=1 // pred_region
      %13 = vsyncadd [#allocation3], 0
      %s14 = sshll.u32 %s0, 4
      %s15 = int_to_ptr.hbm [resolvable:$true] %s14
      %s16 = sshll.u32 [#allocation2], 4
      %s17 = int_to_ptr.vmem [resolvable:$true] %s16
      %22 = dma.hbm_to_vmem [thread:$0]  %s15, 256, %s17, [#allocation3], 128, 128, 8
    $region5: #{tpu_custom_call.1} parent=1 // pred_fallthru
      _
    // Predicated region
    $region6: #{tpu_custom_call.1} parent=1 // pred_check
      _
    $region7: #{tpu_custom_call.1} parent=1 // pred_check_branch
      %24 = sbr.rel (0) target = $region9
    $region8: #{tpu_custom_call.1} parent=1 // pred_region
      %26 = vsyncadd [#allocation6], 0
      %s28 = sshll.u32 %s1, 4
      %s29 = int_to_ptr.hbm [resolvable:$true] %s28
      %s30 = sshll.u32 [#allocation5], 4
      %s31 = int_to_ptr.vmem [resolvable:$true] %s30
      %33 = dma.hbm_to_vmem [thread:$0]  %s29, 32, %s31, [#allocation6]
    $region9: #{tpu_custom_call.1} parent=1 // pred_fallthru
      _
    // Predicated region
    $region10: #{tpu_custom_call.1} parent=1 // pred_check
      _
    $region11: #{tpu_custom_call.1} parent=1 // pred_check_branch
      %35 = sbr.rel (0) target = $region13
    $region12: #{tpu_custom_call.1} parent=1 // pred_region
      %37 = dma.done [#allocation3], 256
    $region13: #{tpu_custom_call.1} parent=1 // pred_fallthru
      _
    // Predicated region
    $region14: #{tpu_custom_call.1} parent=1 // pred_check
      _
    $region15: #{tpu_custom_call.1} parent=1 // pred_check_branch
      %39 = sbr.rel (0) target = $region17
    $region16: #{tpu_custom_call.1} parent=1 // pred_region
      %41 = dma.done [#allocation6], 32
    $region17: #{tpu_custom_call.1} parent=1 // pred_fallthru
      _
    %v42 = vld [vmem:[#allocation2] sm:$0xff]
    %v43 = vld [vmem:[#allocation2 + $0x8] sm:$0xff]
    %v44 = vld [vmem:[#allocation5] sm:$0x3]
    %v45 = vperm.slane %v44, 0
    %v46 = vlaneseq
    %v47 = vshrl.u32 %v46, 7
    %49 = vset.pattern.permute.xlu0 %v47
    %50 = vperm.xlu0 %49, %v45
    %v51 = vpop.permute.xlu0 %50
    %v52 = vperm.slane %v44, 1
    %v53 = vlaneseq
    %v54 = vshrl.u32 %v53, 7
    %56 = vset.pattern.permute.xlu0 %v54
    %57 = vperm.xlu0 %56, %v52
    %v58 = vpop.permute.xlu0 %57
    %v62 = vunpack.c.l.s4 839922192
    %v63 = vunpack.c.0.s8 %v62
    %v64 = vperm.slane %v51, %v63
    %v66 = vunpack.c.l.s4 839922192
    %v67 = vunpack.c.0.s8 %v66
    %v68 = vperm.slane %v58, %v67
    %v71 = vmul.f32 %v42, %v64
    %v72 = vmul.f32 %v43, %v68
    %75 = vst [vmem:[#allocation1] ss:$2 sm:$0xff] %v71
    %v76 = vld.sshfl [vmem:[#allocation1] sm:$0xff pattern:$0x75316420]
    %v77 = vld.sshfl [vmem:[#allocation1 + $0x8] sm:$0xff pattern:$0x75316420]
    %s78 = scalar_lea.vmem [#allocation1], 16
    %79 = vst [vmem:[%s78] ss:$2 sm:$0xff] %v72
    %v80 = vld.sshfl [vmem:[#allocation1 + $0x10] sm:$0xff pattern:$0x75316420]
    %v81 = vld.sshfl [vmem:[#allocation1 + $0x18] sm:$0xff pattern:$0x75316420]
    %vm86 = vcmask 1043456
    %v87 = vsel %vm86, %v76, 0.0
    %v88 = vrot.slane %v87, 4
    %v89 = vadd.f32 %v87, %v88
    %v90 = vrot.slane %v89, 2
    %v91 = vadd.f32 %v89, %v90
    %v92 = vrot.slane %v91, 1
    %v93 = vadd.f32 %v91, %v92
    %v94 = vsel %vm86, %v77, 0.0
    %v95 = vrot.slane %v94, 4
    %v96 = vadd.f32 %v94, %v95
    %v97 = vrot.slane %v96, 2
    %v98 = vadd.f32 %v96, %v97
    %v99 = vrot.slane %v98, 1
    %v100 = vadd.f32 %v98, %v99
    %v101 = vsel %vm86, %v80, 0.0
    %v102 = vrot.slane %v101, 4
    %v103 = vadd.f32 %v101, %v102
    %v104 = vrot.slane %v103, 2
    %v105 = vadd.f32 %v103, %v104
    %v106 = vrot.slane %v105, 1
    %v107 = vadd.f32 %v105, %v106
    %v108 = vsel %vm86, %v81, 0.0
    %v109 = vrot.slane %v108, 4
    %v110 = vadd.f32 %v108, %v109
    %v111 = vrot.slane %v110, 2
    %v112 = vadd.f32 %v110, %v111
    %v113 = vrot.slane %v112, 1
    %v114 = vadd.f32 %v112, %v113
    %vm119 = vcmask 1041409
    %v120 = vsel %vm119, %v107, %v93
    %v121 = vsel %vm119, %v114, %v100
    %vm124 = vcmask 1041408
    %v125 = vsel %vm124, %v120, -inf
    %v126 = vsel %vm124, %v121, -inf
    %v127 = vmax.f32 %v125, %v126
    %128 = vmax.xlane.f32.xlu0 %v127
    %v129 = vpop.xlane.xlu0 %128
    %v131 = vrot.slane %v129, 1
    %v134 = vsub.f32 %v93, %v129
    %v135 = vsub.f32 %v100, %v129
    %v136 = vsub.f32 %v107, %v131
    %v137 = vsub.f32 %v114, %v131
    %v138 = vmul.f32 %v134, 1.442695
    %v139 = vpow.pop %v138
    %v140 = vmul.f32 %v135, 1.442695
    %v141 = vpow.pop %v140
    %v142 = vmul.f32 %v136, 1.442695
    %v143 = vpow.pop %v142
    %v144 = vmul.f32 %v137, 1.442695
    %v145 = vpow.pop %v144
    %v150 = vrot.slane %v143, 7
    %v151 = vsel %vm119, %v150, %v139
    %v152 = vrot.slane %v145, 7
    %v153 = vsel %vm119, %v152, %v141
    %v156 = vsel %vm124, %v151, 0.0
    %v157 = vsel %vm124, %v153, 0.0
    %v158 = vadd.f32 %v156, %v157
    %159 = vadd.xlane.f32.xlu0 %v158
    %v160 = vpop.xlane.xlu0 %159
    %v161 = vperm.slane %v139, 0
    %v162 = vperm.slane %v141, 0
    %v163 = vperm.slane %v143, 0
    %v164 = vperm.slane %v145, 0
    %v169 = vrot.slane %v162, 4
    %v170 = vrot.slane %v164, 4
    %v171 = vsel %vm86, %v161, %v169
    %v172 = vsel %vm86, %v163, %v170
    %v175 = vmul.f32 %v42, %v171
    %v176 = vmul.f32 %v43, %v172
    %179 = vst [vmem:[#allocation1] ss:$2 sm:$0xff] %v175
    %v180 = vld.sshfl [vmem:[#allocation1] sm:$0xff pattern:$0x75316420]
    %v181 = vld.sshfl [vmem:[#allocation1 + $0x8] sm:$0xff pattern:$0x75316420]
    %s182 = scalar_lea.vmem [#allocation1], 16
    %183 = vst [vmem:[%s182] ss:$2 sm:$0xff] %v176
    %v184 = vld.sshfl [vmem:[#allocation1 + $0x10] sm:$0xff pattern:$0x75316420]
    %v185 = vld.sshfl [vmem:[#allocation1 + $0x18] sm:$0xff pattern:$0x75316420]
    %v190 = vsel %vm86, %v180, 0.0
    %v191 = vsel %vm86, %v181, 0.0
    %v192 = vadd.f32 %v190, %v191
    %193 = vadd.xlane.f32.xlu0 %v192
    %v194 = vpop.xlane.xlu0 %193
    %v195 = vsel %vm86, %v184, 0.0
    %v196 = vsel %vm86, %v185, 0.0
    %v197 = vadd.f32 %v195, %v196
    %198 = vadd.xlane.f32.xlu0 %v197
    %v199 = vpop.xlane.xlu0 %198
    %v201 = vperm.slane %v160, 0
    %v202 = vperm.slane %v160, 1
    %v205 = vrcp.pop %v201
    %v206 = vmul.f32 %v201, %v205
    %v207 = vsub.f32 1.0, %v206
    %v208 = vmul.f32 %v205, %v207
    %v209 = vadd.f32 %v205, %v208
    %vm210 = vweird.f32 %v201
    %vm211 = vweird.f32 %v205
    %vm212 = vmor %vm210, %vm211
    %v213 = vsel %vm212, %v205, %v209
    %v214 = vand.u32 2147483647, %v201
    %vm215 = vcmp.eq.f32.partialorder %v214, 8.507059e+37
    %v216 = vand.u32 %v201, 2147483648
    %v217 = vor.u32 1.1754944e-38, %v216
    %v218 = vsel %vm215, %v217, %v213
    %v219 = vmul.f32 %v194, %v218
    %v220 = vrcp.pop %v202
    %v221 = vmul.f32 %v202, %v220
    %v222 = vsub.f32 1.0, %v221
    %v223 = vmul.f32 %v220, %v222
    %v224 = vadd.f32 %v220, %v223
    %vm225 = vweird.f32 %v202
    %vm226 = vweird.f32 %v220
    %vm227 = vmor %vm225, %vm226
    %v228 = vsel %vm227, %v220, %v224
    %v229 = vand.u32 2147483647, %v202
    %vm230 = vcmp.eq.f32.partialorder %v229, 8.507059e+37
    %v231 = vand.u32 %v202, 2147483648
    %v232 = vor.u32 1.1754944e-38, %v231
    %v233 = vsel %vm230, %v232, %v228
    %v234 = vmul.f32 %v199, %v233
    %237 = vset.pattern.permute.xlu0 0
    %238 = vperm.xlu0 %237, %v219
    %v239 = vpop.permute.xlu0 %238
    %240 = vset.pattern.permute.xlu0 0
    %241 = vperm.xlu0 %240, %v234
    %v242 = vpop.permute.xlu0 %241
    %v243 = vlaneseq
    %v244 = vand.u32 %v243, 127
    %v245 = vperm.slane %v239, %v244
    %v246 = vperm.slane %v242, %v244
    %v247 = vsel %vm119, %v246, %v245
    %vm249 = vcmask 25600
    %250 = vst.msk [vmem:[#allocation7] sm:$0x3] %vm249, %v247
    // Predicated region
    $region18: #{tpu_custom_call.1} parent=1 // pred_check
      _
    $region19: #{tpu_custom_call.1} parent=1 // pred_check_branch
      %252 = sbr.rel (0) target = $region21
    $region20: #{tpu_custom_call.1} parent=1 // pred_region
      %254 = vsyncadd [#allocation4], 0
      %s256 = sshll.u32 [#allocation7], 4
      %s257 = int_to_ptr.vmem [resolvable:$true] %s256
      %s258 = sshll.u32 %s2, 4
      %s259 = int_to_ptr.hbm [resolvable:$true] %s258
      %261 = dma.vmem_to_hbm [thread:$0]  %s257, 32, %s259, [#allocation4]
    $region21: #{tpu_custom_call.1} parent=1 // pred_fallthru
      _
    // Predicated region
    $region22: #{tpu_custom_call.1} parent=1 // pred_check
      _
    $region23: #{tpu_custom_call.1} parent=1 // pred_check_branch
      %263 = sbr.rel (0) target = $region25
    $region24: #{tpu_custom_call.1} parent=1 // pred_region
      %265 = dma.done [#allocation4], 32
    $region25: #{tpu_custom_call.1} parent=1 // pred_fallthru
      _
    %266 = vsyncpa [#allocation3], 1
    %267 = vsyncpa [#allocation6], 1
    %268 = vsyncpa [#allocation4], 1

</llo_original>
